<compile_context>
chip_gen: v5e
topology: v5e:2x2
jax: 0.10.0
libtpu: 0.0.40
codegen_flags: <defaults>
</compile_context>

<pallas_src>
import functools

import jax
import jax.numpy as jnp
from jax.experimental import pallas as pl
from jax.experimental.pallas import tpu as pltpu


def _cdiv(a, b):
    return -(-a // b)


def _round_up(x, m):
    return _cdiv(x, m) * m


def _vmem_capacity_bytes():
    try:
        return int(pltpu.get_tpu_info().vmem_capacity_bytes)
    except Exception:
        return 64 << 20  # conservative (v7x-sized) fallback


def _plan_row_tiling(n_rows, n_cols, itemsize, row_tile, want_splits, vmem_cap):
    """Pick (row_tile, num_tiles, num_splits).

    The tile is sized by the f32 working-set bytes per tile, aligned to the
    sublane packing of the input dtype; the tile count is nudged (if possible)
    to be divisible by `want_splits` so rows can shard across TensorCores via
    a leading "parallel" grid axis.  y is never padded: ragged tails become a
    masked partial last block.
    """
    align = max(8, 32 // max(1, itemsize))            # 8 for f32, 16 for bf16
    work_per_row = max(n_cols, 128) * 4               # f32 working bytes / row
    work_target = (4 << 20) if vmem_cap >= (96 << 20) else (2 << 20)

    if row_tile is None:
        tr = max(align, (work_target // work_per_row) // align * align)
    else:
        tr = max(align, _round_up(int(row_tile), align))
    tr = min(tr, _round_up(n_rows, align))

    n_tiles = _cdiv(n_rows, tr)
    n_splits = 1
    if want_splits > 1:
        if n_tiles % want_splits != 0:
            target_tiles = _round_up(max(n_tiles, want_splits), want_splits)
            tr_new = _round_up(_cdiv(n_rows, target_tiles), align)
            if tr_new >= align and _cdiv(n_rows, tr_new) % want_splits == 0:
                tr = tr_new
                n_tiles = _cdiv(n_rows, tr)
        if n_tiles % want_splits == 0 and n_tiles >= want_splits:
            n_splits = want_splits
    return int(tr), int(n_tiles), int(n_splits)


def _bridge_prob_loss_kernel(
    y_ref,      # (TR, C)  logits tile (natural row order; last tile may be ragged)
    meta_ref,   # (TR, 8)  f32 [idx1, idx2, w1, w2, mask_ori, mask_mix, 0, 0]
    out_ref,    # (8, 128) f32 per-split partial sums ([0,0]=ori, [0,1]=mix)
    acc_ref,    # (2,)     f32 SMEM scratch accumulator
    *,
    num_classes: int,
    epsilon: float,
):
    k = pl.program_id(1)

    @pl.when(k == 0)
    def _init():
        acc_ref[0] = 0.0
        acc_ref[1] = 0.0

    z = y_ref[...].astype(jnp.float32)                              # (TR, C)
    z = z - jnp.max(z, axis=-1, keepdims=True)
    lse = jnp.log(jnp.sum(jnp.exp(z), axis=-1, keepdims=True))      # (TR, 1)

    meta = meta_ref[...]
    idx1 = meta[:, 0:1].astype(jnp.int32)                           # (TR, 1)
    idx2 = meta[:, 1:2].astype(jnp.int32)
    one_m_eps = 1.0 - epsilon
    w1s = one_m_eps * meta[:, 2:3]                                  # (1-eps)*w1
    w2s = one_m_eps * meta[:, 3:4]                                  # (1-eps)*w2
    m_ori = meta[:, 4:5]
    m_mix = meta[:, 5:6]

    smooth = epsilon / num_classes
    iota = jax.lax.broadcasted_iota(jnp.int32, z.shape, 1)
    # Folded per-element weight: one lane reduction instead of three.
    weight = (jnp.where(iota == idx1, w1s, 0.0)
              + jnp.where(iota == idx2, w2s, 0.0)
              + smooth)
    wsum = jnp.sum(weight * z, axis=-1, keepdims=True)              # (TR, 1)
    coef = w1s + w2s + epsilon            # == (1-eps)*(w1+w2) + eps
    per_row = coef * lse - wsum                                     # (TR, 1)

    # NaN-safe masking: ragged-tail rows carry garbage logits (per_row may be
    # NaN/Inf) but their metadata masks are exactly 0 -> select 0.0.
    acc_ref[0] += jnp.sum(jnp.where(m_ori > 0.0, per_row, 0.0))
    acc_ref[1] += jnp.sum(jnp.where(m_mix > 0.0, per_row, 0.0))

    @pl.when(k == pl.num_programs(1) - 1)
    def _finalize():
        lane = jax.lax.broadcasted_iota(jnp.int32, out_ref.shape, 1)
        out_ref[...] = jnp.where(lane == 0, acc_ref[0],
                                 jnp.where(lane == 1, acc_ref[1], 0.0))


@functools.partial(
    jax.jit,
    static_argnames=("num_classes", "epsilon", "device_num", "row_tile",
                     "num_row_splits"),
)
def bridge_prob_loss(y, labels, lam, *, num_classes, epsilon=0.1, device_num=4,
                     row_tile=None, num_row_splits=2):
    """JAX/Pallas equivalent of BridgeProbLoss.forward.

    Args:
      y:      (device_num * 3n, C) float (f32 or bf16) logits
              (per device: n src rows, n tgt rows, n mixed rows).
      labels: (device_num * 2n,)   int class ids for the original (src+tgt) rows.
      lam:    (device_num * n,)    float mixing coefficients.
    Returns:
      (loss_ori, loss_bridge_prob) float32 scalars.
    """
    y = jnp.asarray(y)
    r, c = y.shape
    assert c == num_classes
    assert num_classes <= (1 << 24)          # indices carried exactly in f32
    assert r % (3 * device_num) == 0
    n = r // (3 * device_num)                # samples per split per device
    n_ori = device_num * 2 * n
    n_mix = device_num * n
    assert labels.shape == (n_ori,)
    assert lam.shape == (n_mix,)

    # ---- tiny per-row metadata in y's natural row order (single (R, 8) f32) ----
    labels3 = labels.astype(jnp.float32).reshape(device_num, 2, n)
    lab_s, lab_t = labels3[:, 0, :], labels3[:, 1, :]                # (dev, n)
    lam2 = lam.astype(jnp.float32).reshape(device_num, n)

    ones2n = jnp.ones((device_num, 2 * n), jnp.float32)
    zeros2n = jnp.zeros((device_num, 2 * n), jnp.float32)
    onesn = jnp.ones((device_num, n), jnp.float32)

    idx1 = jnp.concatenate([lab_s, lab_t, lab_s], axis=1).reshape(-1)
    idx2 = jnp.concatenate([lab_s, lab_t, lab_t], axis=1).reshape(-1)
    w1 = jnp.concatenate([ones2n, lam2], axis=1).reshape(-1)
    w2 = jnp.concatenate([zeros2n, 1.0 - lam2], axis=1).reshape(-1)
    m_mix = jnp.concatenate([zeros2n, onesn], axis=1).reshape(-1)
    m_ori = 1.0 - m_mix
    zcol = jnp.zeros_like(w1)
    meta = jnp.stack([idx1, idx2, w1, w2, m_ori, m_mix, zcol, zcol], axis=1)  # (R,8)

    # ---- tiling plan (no padding of y; only the 8-column metadata is padded) ----
    vmem_cap = _vmem_capacity_bytes()
    tr, n_tiles, n_splits = _plan_row_tiling(
        r, c, y.dtype.itemsize, row_tile, num_row_splits, vmem_cap)
    tiles_per_split = n_tiles // n_splits

    r_meta = n_tiles * tr
    if r_meta != r:
        meta = jnp.pad(meta, ((0, r_meta - r), (0, 0)))   # phantom masks = 0

    kernel = functools.partial(_bridge_prob_loss_kernel,
                               num_classes=num_classes, epsilon=float(epsilon))

    in_tile_bytes = tr * max(c, 128) * y.dtype.itemsize
    work_tile_bytes = tr * max(c, 128) * 4
    vmem_limit = int(min(
        max(2 * in_tile_bytes + 4 * work_tile_bytes + (8 << 20), 32 << 20),
        (vmem_cap * 3) // 4))

    cost = pl.CostEstimate(
        flops=9 * r * c,
        transcendentals=r * c,
        bytes_accessed=int(y.size * y.dtype.itemsize + meta.size * 4
                           + n_splits * 8 * 128 * 4),
    )

    out = pl.pallas_call(
        kernel,
        grid=(n_splits, tiles_per_split),
        in_specs=[
            pl.BlockSpec((tr, c), lambda p, k: (p * tiles_per_split + k, 0)),
            pl.BlockSpec((tr, 8), lambda p, k: (p * tiles_per_split + k, 0)),
        ],
        out_specs=pl.BlockSpec((8, 128), lambda p, k: (p, 0)),
        out_shape=jax.ShapeDtypeStruct((n_splits * 8, 128), jnp.float32),
        scratch_shapes=[pltpu.SMEM((2,), jnp.float32)],
        compiler_params=pltpu.CompilerParams(
            dimension_semantics=("parallel", "arbitrary"),
            vmem_limit_bytes=vmem_limit,
        ),
        cost_estimate=cost,
    )(y, meta)

    parts = out.reshape(n_splits, 8, 128)
    loss_ori = jnp.sum(parts[:, 0, 0]) / jnp.float32(n_ori)
    loss_mix = jnp.sum(parts[:, 0, 1]) / jnp.float32(n_mix)
    return loss_ori, loss_mix


def _reference(y, labels, lam, *, num_classes, epsilon=0.1, device_num=4):
    """Pure-JAX reference mirroring the PyTorch forward exactly."""
    c = y.shape[-1]
    y3 = y.reshape(device_num, -1, c)
    n = y3.shape[1] // 3
    y_s, y_t, y_mixed = y3[:, :n], y3[:, n:2 * n], y3[:, 2 * n:]
    y_ori = jnp.concatenate([y_s, y_t], axis=1).reshape(-1, c)
    y_mixed = y_mixed.reshape(-1, c)
    logp_ori = jax.nn.log_softmax(y_ori, axis=1)
    logp_mix = jax.nn.log_softmax(y_mixed, axis=1)
    onehot = jax.nn.one_hot(labels, c, dtype=jnp.float32)
    oh3 = onehot.reshape(device_num, -1, c)
    oh_s = oh3[:, :n].reshape(-1, c)
    oh_t = oh3[:, n:].reshape(-1, c)
    soft = (1 - epsilon) * onehot + epsilon / num_classes
    lam = lam.reshape(-1, 1)
    soft_mix = lam * oh_s + (1.0 - lam) * oh_t
    soft_mix = (1 - epsilon) * soft_mix + epsilon / num_classes
    loss_ori = jnp.mean(jnp.sum(-soft * logp_ori, axis=1))
    loss_mix = jnp.mean(jnp.sum(-soft_mix * logp_mix, axis=1))
    return loss_ori, loss_mix


if __name__ == "__main__":
    key = jax.random.PRNGKey(0)
    num_classes = 128
    device_num = 2
    n = 4                              # per-device samples per split (src/tgt/mixed)
    total_rows = device_num * 3 * n    # 24

    k1, k2, k3 = jax.random.split(key, 3)
    y = jax.random.normal(k1, (total_rows, num_classes), dtype=jnp.float32)
    labels = jax.random.randint(k2, (device_num * 2 * n,), 0, num_classes,
                                dtype=jnp.int32)
    lam = jax.random.uniform(k3, (device_num * n,), dtype=jnp.float32)

    ref_ori, ref_mix = _reference(
        y, labels, lam, num_classes=num_classes, epsilon=0.1,
        device_num=device_num)

    # (a) default plan: auto tile, 2-way "parallel" row split, ragged last block.
    lo_a, lm_a = bridge_prob_loss(
        y, labels, lam, num_classes=num_classes, epsilon=0.1,
        device_num=device_num)
    # (b) small tiles, single split: multi-step sequential accumulation path.
    lo_b, lm_b = bridge_prob_loss(
        y, labels, lam, num_classes=num_classes, epsilon=0.1,
        device_num=device_num, row_tile=8, num_row_splits=1)
    # (c) ragged last block with a single split (accumulate across partial tile).
    lo_c, lm_c = bridge_prob_loss(
        y, labels, lam, num_classes=num_classes, epsilon=0.1,
        device_num=device_num, row_tile=16, num_row_splits=1)
    # (d) bf16 logits path (compute stays f32 in-kernel).
    y_bf16 = y.astype(jnp.bfloat16)
    ref_ori16, ref_mix16 = _reference(
        y_bf16.astype(jnp.float32), labels, lam, num_classes=num_classes,
        epsilon=0.1, device_num=device_num)
    lo_d, lm_d = bridge_prob_loss(
        y_bf16, labels, lam, num_classes=num_classes, epsilon=0.1,
        device_num=device_num)

    jax.block_until_ready((lo_a, lm_a, lo_b, lm_b, lo_c, lm_c, lo_d, lm_d))

    assert jnp.allclose(lo_a, ref_ori, atol=1e-4, rtol=1e-4)
    assert jnp.allclose(lm_a, ref_mix, atol=1e-4, rtol=1e-4)
    assert jnp.allclose(lo_b, ref_ori, atol=1e-4, rtol=1e-4)
    assert jnp.allclose(lm_b, ref_mix, atol=1e-4, rtol=1e-4)
    assert jnp.allclose(lo_c, ref_ori, atol=1e-4, rtol=1e-4)
    assert jnp.allclose(lm_c, ref_mix, atol=1e-4, rtol=1e-4)
    assert jnp.allclose(lo_d, ref_ori16, atol=2e-3, rtol=2e-3)
    assert jnp.allclose(lm_d, ref_mix16, atol=2e-3, rtol=2e-3)

    print("KERNEL_OK")
</pallas_src>

<mosaic_0001>
module attributes {stable_mosaic.version = 11 : i64} {
  func.func @_bridge_prob_loss_kernel(%arg0: i32, %arg1: i32, %arg2: memref<16x128xf32, #tpu.memory_space<vmem>>, %arg3: memref<16x8xf32, #tpu.memory_space<vmem>>, %arg4: memref<8x128xf32, #tpu.memory_space<vmem>>, %arg5: memref<2xf32, #tpu.memory_space<smem>>) attributes {dimension_semantics = [#tpu.dimension_semantics<parallel>, #tpu.dimension_semantics<arbitrary>], iteration_bounds = array<i64: 2, 1>, scalar_prefetch = 0 : i64, scratch_operands = 1 : i64, tpu.core_type = #tpu.core_type<tc>, window_params = [{transform_indices = @transform_0, window_bounds = array<i64: 16, 128>}, {transform_indices = @transform_1, window_bounds = array<i64: 16, 8>}, {transform_indices = @transform_2, window_bounds = array<i64: 8, 128>}]} {
    %c0_i32 = arith.constant 0 : i32
    %0 = arith.cmpi eq, %arg1, %c0_i32 : i32
    %1 = arith.extui %0 : i1 to i32
    %c0_i32_0 = arith.constant 0 : i32
    %2 = arith.cmpi ne, %1, %c0_i32_0 : i32
    scf.if %2 {
      %cst_23 = arith.constant 0.000000e+00 : f32
      %c0_24 = arith.constant 0 : index
      %74 = memref.load %arg5[%c0_24] : memref<2xf32, #tpu.memory_space<smem>>
      memref.store %cst_23, %arg5[%c0_24] : memref<2xf32, #tpu.memory_space<smem>>
      %cst_25 = arith.constant 0.000000e+00 : f32
      %c1_26 = arith.constant 1 : index
      %75 = memref.load %arg5[%c1_26] : memref<2xf32, #tpu.memory_space<smem>>
      memref.store %cst_25, %arg5[%c1_26] : memref<2xf32, #tpu.memory_space<smem>>
    } else {
    }
    %c0 = arith.constant 0 : index
    %c0_1 = arith.constant 0 : index
    %3 = vector.load %arg2[%c0, %c0_1] : memref<16x128xf32, #tpu.memory_space<vmem>>, vector<16x128xf32>
    %cst = arith.constant dense<0xFF800000> : vector<16xf32>
    %4 = vector.multi_reduction <maximumf>, %3, %cst [1] : vector<16x128xf32> to vector<16xf32>
    %5 = vector.shape_cast %4 : vector<16xf32> to vector<16x1xf32>
    %6 = vector.broadcast %5 : vector<16x1xf32> to vector<16x128xf32>
    %7 = arith.subf %3, %6 : vector<16x128xf32>
    %8 = math.exp %7 : vector<16x128xf32>
    %cst_2 = arith.constant dense<0.000000e+00> : vector<16xf32>
    %9 = vector.multi_reduction <add>, %8, %cst_2 [1] : vector<16x128xf32> to vector<16xf32>
    %10 = vector.shape_cast %9 : vector<16xf32> to vector<16x1xf32>
    %11 = math.log %10 : vector<16x1xf32>
    %c0_3 = arith.constant 0 : index
    %c0_4 = arith.constant 0 : index
    %12 = vector.load %arg3[%c0_3, %c0_4] : memref<16x8xf32, #tpu.memory_space<vmem>>, vector<16x8xf32>
    %13 = vector.extract_strided_slice %12 {offsets = [0, 0], sizes = [16, 1], strides = [1, 1]} : vector<16x8xf32> to vector<16x1xf32>
    %14 = arith.fptosi %13 : vector<16x1xf32> to vector<16x1xi32>
    %15 = vector.extract_strided_slice %12 {offsets = [0, 1], sizes = [16, 1], strides = [1, 1]} : vector<16x8xf32> to vector<16x1xf32>
    %16 = arith.fptosi %15 : vector<16x1xf32> to vector<16x1xi32>
    %17 = vector.extract_strided_slice %12 {offsets = [0, 2], sizes = [16, 1], strides = [1, 1]} : vector<16x8xf32> to vector<16x1xf32>
    %cst_5 = arith.constant 0.899999976 : f32
    %18 = vector.broadcast %cst_5 : f32 to vector<16x1xf32>
    %19 = arith.mulf %18, %17 : vector<16x1xf32>
    %20 = vector.extract_strided_slice %12 {offsets = [0, 3], sizes = [16, 1], strides = [1, 1]} : vector<16x8xf32> to vector<16x1xf32>
    %cst_6 = arith.constant 0.899999976 : f32
    %21 = vector.broadcast %cst_6 : f32 to vector<16x1xf32>
    %22 = arith.mulf %21, %20 : vector<16x1xf32>
    %23 = vector.extract_strided_slice %12 {offsets = [0, 4], sizes = [16, 1], strides = [1, 1]} : vector<16x8xf32> to vector<16x1xf32>
    %24 = vector.extract_strided_slice %12 {offsets = [0, 5], sizes = [16, 1], strides = [1, 1]} : vector<16x8xf32> to vector<16x1xf32>
    %25 = tpu.iota {dimensions = array<i32: 1>} : vector<16x128xi32>
    %26 = vector.broadcast %14 : vector<16x1xi32> to vector<16x128xi32>
    %27 = arith.cmpi eq, %25, %26 : vector<16x128xi32>
    %cst_7 = arith.constant 0.000000e+00 : f32
    %28 = vector.shape_cast %19 : vector<16x1xf32> to vector<16x1xf32>
    %29 = vector.broadcast %28 : vector<16x1xf32> to vector<16x128xf32>
    %30 = vector.broadcast %cst_7 : f32 to vector<16x128xf32>
    %31 = arith.select %27, %29, %30 : vector<16x128xi1>, vector<16x128xf32>
    %32 = vector.broadcast %16 : vector<16x1xi32> to vector<16x128xi32>
    %33 = arith.cmpi eq, %25, %32 : vector<16x128xi32>
    %cst_8 = arith.constant 0.000000e+00 : f32
    %34 = vector.shape_cast %22 : vector<16x1xf32> to vector<16x1xf32>
    %35 = vector.broadcast %34 : vector<16x1xf32> to vector<16x128xf32>
    %36 = vector.broadcast %cst_8 : f32 to vector<16x128xf32>
    %37 = arith.select %33, %35, %36 : vector<16x128xi1>, vector<16x128xf32>
    %38 = arith.addf %31, %37 : vector<16x128xf32>
    %cst_9 = arith.constant 7.812500e-04 : f32
    %39 = vector.broadcast %cst_9 : f32 to vector<16x128xf32>
    %40 = arith.addf %38, %39 : vector<16x128xf32>
    %41 = arith.mulf %40, %7 : vector<16x128xf32>
    %cst_10 = arith.constant dense<0.000000e+00> : vector<16xf32>
    %42 = vector.multi_reduction <add>, %41, %cst_10 [1] : vector<16x128xf32> to vector<16xf32>
    %43 = vector.shape_cast %42 : vector<16xf32> to vector<16x1xf32>
    %44 = arith.addf %19, %22 : vector<16x1xf32>
    %cst_11 = arith.constant 1.000000e-01 : f32
    %45 = vector.broadcast %cst_11 : f32 to vector<16x1xf32>
    %46 = arith.addf %44, %45 : vector<16x1xf32>
    %47 = arith.mulf %46, %11 : vector<16x1xf32>
    %48 = arith.subf %47, %43 : vector<16x1xf32>
    %c0_12 = arith.constant 0 : index
    %49 = memref.load %arg5[%c0_12] : memref<2xf32, #tpu.memory_space<smem>>
    %cst_13 = arith.constant 0.000000e+00 : f32
    %50 = vector.broadcast %cst_13 : f32 to vector<16x1xf32>
    %51 = arith.cmpf ogt, %23, %50 : vector<16x1xf32>
    %cst_14 = arith.constant 0.000000e+00 : f32
    %52 = vector.broadcast %cst_14 : f32 to vector<16x1xf32>
    %53 = arith.select %51, %48, %52 : vector<16x1xi1>, vector<16x1xf32>
    %54 = vector.shape_cast %53 : vector<16x1xf32> to vector<1x16x1xf32>
    %cst_15 = arith.constant dense<0.000000e+00> : vector<1xf32>
    %55 = vector.multi_reduction <add>, %54, %cst_15 [1, 2] : vector<1x16x1xf32> to vector<1xf32>
    %56 = vector.shape_cast %55 : vector<1xf32> to vector<1x1x1xf32>
    %57 = vector.extract %56[0, 0, 0] : f32 from vector<1x1x1xf32>
    %58 = arith.addf %49, %57 : f32
    %c0_16 = arith.constant 0 : index
    %59 = memref.load %arg5[%c0_16] : memref<2xf32, #tpu.memory_space<smem>>
    memref.store %58, %arg5[%c0_16] : memref<2xf32, #tpu.memory_space<smem>>
    %c1 = arith.constant 1 : index
    %60 = memref.load %arg5[%c1] : memref<2xf32, #tpu.memory_space<smem>>
    %cst_17 = arith.constant 0.000000e+00 : f32
    %61 = vector.broadcast %cst_17 : f32 to vector<16x1xf32>
    %62 = arith.cmpf ogt, %24, %61 : vector<16x1xf32>
    %cst_18 = arith.constant 0.000000e+00 : f32
    %63 = vector.broadcast %cst_18 : f32 to vector<16x1xf32>
    %64 = arith.select %62, %48, %63 : vector<16x1xi1>, vector<16x1xf32>
    %65 = vector.shape_cast %64 : vector<16x1xf32> to vector<1x16x1xf32>
    %cst_19 = arith.constant dense<0.000000e+00> : vector<1xf32>
    %66 = vector.multi_reduction <add>, %65, %cst_19 [1, 2] : vector<1x16x1xf32> to vector<1xf32>
    %67 = vector.shape_cast %66 : vector<1xf32> to vector<1x1x1xf32>
    %68 = vector.extract %67[0, 0, 0] : f32 from vector<1x1x1xf32>
    %69 = arith.addf %60, %68 : f32
    %c1_20 = arith.constant 1 : index
    %70 = memref.load %arg5[%c1_20] : memref<2xf32, #tpu.memory_space<smem>>
    memref.store %69, %arg5[%c1_20] : memref<2xf32, #tpu.memory_space<smem>>
    %c0_i32_21 = arith.constant 0 : i32
    %71 = arith.cmpi eq, %arg1, %c0_i32_21 : i32
    %72 = arith.extui %71 : i1 to i32
    %c0_i32_22 = arith.constant 0 : i32
    %73 = arith.cmpi ne, %72, %c0_i32_22 : i32
    scf.if %73 {
      %74 = tpu.iota {dimensions = array<i32: 1>} : vector<8x128xi32>
      %c0_i32_23 = arith.constant 0 : i32
      %75 = vector.broadcast %c0_i32_23 : i32 to vector<8x128xi32>
      %76 = arith.cmpi eq, %74, %75 : vector<8x128xi32>
      %c0_24 = arith.constant 0 : index
      %77 = memref.load %arg5[%c0_24] : memref<2xf32, #tpu.memory_space<smem>>
      %c1_i32 = arith.constant 1 : i32
      %78 = vector.broadcast %c1_i32 : i32 to vector<8x128xi32>
      %79 = arith.cmpi eq, %74, %78 : vector<8x128xi32>
      %c1_25 = arith.constant 1 : index
      %80 = memref.load %arg5[%c1_25] : memref<2xf32, #tpu.memory_space<smem>>
      %cst_26 = arith.constant 0.000000e+00 : f32
      %81 = vector.broadcast %80 : f32 to vector<8x128xf32>
      %82 = vector.broadcast %cst_26 : f32 to vector<8x128xf32>
      %83 = arith.select %79, %81, %82 : vector<8x128xi1>, vector<8x128xf32>
      %84 = vector.broadcast %77 : f32 to vector<8x128xf32>
      %85 = arith.select %76, %84, %83 : vector<8x128xi1>, vector<8x128xf32>
      %c0_27 = arith.constant 0 : index
      %c0_28 = arith.constant 0 : index
      %86 = vector.load %arg4[%c0_27, %c0_28] : memref<8x128xf32, #tpu.memory_space<vmem>>, vector<8x128xf32>
      tpu.vector_store %arg4[%c0_27, %c0_28], %85 {strides = array<i32>} : memref<8x128xf32, #tpu.memory_space<vmem>>, vector<8x128xf32>,
    } else {
    }
    return
  }
  func.func @transform_0(%arg0: i32, %arg1: i32) -> (i32, i32) {
    %c1_i32 = arith.constant 1 : i32
    %0 = arith.muli %arg0, %c1_i32 : i32
    %1 = arith.addi %0, %arg1 : i32
    %c0_i32 = arith.constant 0 : i32
    %c0_i32_0 = arith.constant 0 : i32
    return %1, %c0_i32 : i32, i32
  }
  func.func @transform_1(%arg0: i32, %arg1: i32) -> (i32, i32) {
    %c1_i32 = arith.constant 1 : i32
    %0 = arith.muli %arg0, %c1_i32 : i32
    %1 = arith.addi %0, %arg1 : i32
    %c0_i32 = arith.constant 0 : i32
    %c0_i32_0 = arith.constant 0 : i32
    return %1, %c0_i32 : i32, i32
  }
  func.func @transform_2(%arg0: i32, %arg1: i32) -> (i32, i32) {
    %c0_i32 = arith.constant 0 : i32
    %c0_i32_0 = arith.constant 0 : i32
    return %arg0, %c0_i32 : i32, i32
  }
}

</mosaic_0001>

<llo_original>
// kernel: bridge_prob_loss.1
$region0: #{bridge_prob_loss.1}
  #allocation0 [shape = 'u32[]', space=smem, size = 0x4, offset = 0x4, fixed_abs, tag = 'smem constant byte address 0x4 - core index']
  #allocation1 [shape = 'u32[72,128]{1,0:T(1,128)}', space=vmem, size = 0x9000, scoped, tag = 'internal scratch']
  #allocation2 [shape = 'f32[2]{0:T(128)}', space=smem, size = 0x200, scoped, tag = 'scratch operand']
  %s0 = inlined_call_operand.vmem [shape: f32[24,128], index: 0, kind: input, shape index: {}]
  %s1 = inlined_call_operand.vmem [shape: f32[32,8], index: 1, kind: input, shape index: {}]
  %s2 = inlined_call_operand.vmem [shape: f32[16,128], index: 2, kind: output, shape index: {}]
  %s3 = sld [smem:[#allocation0]]
  $region49: #{bridge_prob_loss.1} parent=0
    _
  %s5 = ssub.s32 1, %s3
  %s6 = scalar_select 0, %s5, %s3
  loop: start=0, step=1, limit=4
  $region2: #{bridge_prob_loss.1} parent=0 // loop_pre_header
    _
  $region3: #{bridge_prob_loss.1} parent=0 // loop_header
    %s8 = sphi 0, %s12
    %p9 = scmp.ge.s32.totalorder %s8, 4
    %s15 = sphi 0, %s27
    %s16 = sphi 0, %s23
    %s17 = sphi 0, %s15
    %s18 = sphi 0, %s16
    %s19 = sphi 0, %s17
    %s20 = sphi 0, %s18
    %s32 = sphi 0, %s34
    %s35 = sphi 0, %s32
    %s36 = sphi 0, %s35
    %s52 = sphi 0, %s36
    %s60 = sphi 0, %s62
    %s63 = sphi 0, %s60
    %s64 = sphi 0, %s63
    %s80 = sphi 0, %s64
    %s86 = sphi 0, %s88
    %s89 = sphi 0, %s86
    %s90 = sphi 0, %s89
    %s106 = sphi 0, %s90
  $region4: #{bridge_prob_loss.1} parent=0 // loop_header_branch
    %11 = sbr.rel (%p9) target = $region8
  $region5: #{bridge_prob_loss.1} parent=0 // loop_body
    %s13 = ssub.s32 %s8, 1
    %s14 = ssub.s32 %s8, 2
    %s21 = sadd.s32 1, %s16
    %p22 = scmp.ge.s32.totalorder %s21, 1
    %s23 = scalar_select %p22, 0, %s21
    %s24 = sadd.s32 1, %s15
    %s25 = scalar_select %p22, %s24, %s15
    %p26 = scmp.ge.s32.totalorder %s25, 2
    %s27 = scalar_select %p26, 0, %s25
    %s28 = sadd.s32 %s15, %s16
    %s29 = sadd.s32 %s27, %s23
    %s30 = ssub.s32 %s28, %s29
    %p31 = scmp.eq.s32.totalorder %s30, 0
    %s33 = sadd.s32 %s32, 1
    %s34 = scalar_select %p31, %s32, %s33
    %p37 = pneg %p31
    %p38 = scmp.eq.s32.totalorder %s8, 1
    %p39 = por %p37, %p38
    %p40 = scmp.ne.s32.totalorder %s32, %s35
    %p41 = scmp.eq.s32.totalorder %s8, 0
    %p42 = por %p40, %p41
    %p43 = scmp.ne.s32.totalorder %s32, %s35
    %p44 = scmp.eq.s32.totalorder %s13, 1
    %p45 = por %p43, %p44
    %p46 = scmp.ne.s32.totalorder %s35, %s36
    %p47 = scmp.eq.s32.totalorder %s13, 0
    %p48 = por %p46, %p47
    %p49 = scmp.ne.s32.totalorder %s35, %s36
    %p50 = scmp.eq.s32.totalorder %s14, 1
    %p51 = por %p49, %p50
    %p53 = scmp.ne.s32.totalorder %s36, %s52
    %p54 = scmp.eq.s32.totalorder %s14, 0
    %p55 = por %p53, %p54
    %s56 = sadd.s32 %s15, %s16
    %s57 = sadd.s32 %s27, %s23
    %s58 = ssub.s32 %s56, %s57
    %p59 = scmp.eq.s32.totalorder %s58, 0
    %s61 = sadd.s32 %s60, 1
    %s62 = scalar_select %p59, %s60, %s61
    %p65 = pneg %p59
    %p66 = scmp.eq.s32.totalorder %s8, 1
    %p67 = por %p65, %p66
    %p68 = scmp.ne.s32.totalorder %s60, %s63
    %p69 = scmp.eq.s32.totalorder %s8, 0
    %p70 = por %p68, %p69
    %p71 = scmp.ne.s32.totalorder %s60, %s63
    %p72 = scmp.eq.s32.totalorder %s13, 1
    %p73 = por %p71, %p72
    %p74 = scmp.ne.s32.totalorder %s63, %s64
    %p75 = scmp.eq.s32.totalorder %s13, 0
    %p76 = por %p74, %p75
    %p77 = scmp.ne.s32.totalorder %s63, %s64
    %p78 = scmp.eq.s32.totalorder %s14, 1
    %p79 = por %p77, %p78
    %p81 = scmp.ne.s32.totalorder %s64, %s80
    %p82 = scmp.eq.s32.totalorder %s14, 0
    %p83 = por %p81, %p82
    %s84 = ssub.s32 %s15, %s27
    %p85 = scmp.eq.s32.totalorder %s84, 0
    %s87 = sadd.s32 %s86, 1
    %s88 = scalar_select %p85, %s86, %s87
    %p91 = pneg %p85
    %p92 = scmp.eq.s32.totalorder %s8, 1
    %p93 = por %p91, %p92
    %p94 = scmp.ne.s32.totalorder %s86, %s89
    %p95 = scmp.eq.s32.totalorder %s8, 0
    %p96 = por %p94, %p95
    %p97 = scmp.ne.s32.totalorder %s86, %s89
    %p98 = scmp.eq.s32.totalorder %s13, 1
    %p99 = por %p97, %p98
    %p100 = scmp.ne.s32.totalorder %s89, %s90
    %p101 = scmp.eq.s32.totalorder %s13, 0
    %p102 = por %p100, %p101
    %p103 = scmp.ne.s32.totalorder %s89, %s90
    %p104 = scmp.eq.s32.totalorder %s14, 1
    %p105 = por %p103, %p104
    %p107 = scmp.ne.s32.totalorder %s90, %s106
    %p108 = scmp.eq.s32.totalorder %s14, 0
    %p109 = por %p107, %p108
    %p110 = scmp.le.s32.totalorder 1, %s8
    %p111 = scmp.lt.s32.totalorder %s8, 3
    %p112 = pnand %p110, %p111
    %p113 = pneg %p112
    // Predicated region
    $region9: #{bridge_prob_loss.1} parent=5 // pred_check
      _
    $region10: #{bridge_prob_loss.1} parent=5 // pred_check_branch
      %115 = sbr.rel (%p112) target = $region12
    $region11: #{bridge_prob_loss.1} parent=5 // pred_region
      %s116 = ssub.s32 %s8, 1
    $region12: #{bridge_prob_loss.1} parent=5 // pred_fallthru
      _
    %p117 = scmp.lt.s32.totalorder %s8, 2
    // Predicated region
    $region13: #{bridge_prob_loss.1} parent=5 // pred_check
      %p118 = pneg %p117
    $region14: #{bridge_prob_loss.1} parent=5 // pred_check_branch
      %120 = sbr.rel (%p118) target = $region16
    $region15: #{bridge_prob_loss.1} parent=5 // pred_region
      // Predicated region
      $region17: #{bridge_prob_loss.1} parent=15 // pred_check
        %p121 = pneg %p42
      $region18: #{bridge_prob_loss.1} parent=15 // pred_check_branch
        %123 = sbr.rel (%p121) target = $region20
      $region19: #{bridge_prob_loss.1} parent=15 // pred_region
        %s124 = sadd.s32 %s15, %s16
        %s125 = smul.u32 2, %s124
        %s126 = ssub.s32 3, %s125
        %p127 = scmp.lt.s32.totalorder %s126, 2
        %s128 = scalar_select %p127, %s126, 2
        %s129 = smul.u32 8, %s128
        %p130 = scmp.lt.s32.totalorder %s125, 2
        %s131 = scalar_select %p130, %s125, 2
        %s132 = smul.addr %s131, 8
        %s133 = scalar_lea.vmem %s0, %s132
        %s134 = sadd.s32 %s15, %s16
        %s135 = smul.u32 2, %s134
        %s136 = ssub.s32 3, %s135
        %p137 = scmp.lt.s32.totalorder %s136, 2
        %s138 = scalar_select %p137, %s136, 2
        %s139 = smul.u32 8, %s138
      $region20: #{bridge_prob_loss.1} parent=15 // pred_fallthru
        _
      // Predicated region
      $region21: #{bridge_prob_loss.1} parent=15 // pred_check
        %p140 = pneg %p70
      $region22: #{bridge_prob_loss.1} parent=15 // pred_check_branch
        %142 = sbr.rel (%p140) target = $region24
      $region23: #{bridge_prob_loss.1} parent=15 // pred_region
        %s143 = sadd.s32 %s15, %s16
        %s144 = smul.u32 2, %s143
        %p145 = scmp.lt.s32.totalorder %s144, 3
        %s146 = scalar_select %p145, %s144, 3
        %s147 = smul.addr %s146, 8
        %s148 = scalar_lea.vmem %s1, %s147
        %s149 = sadd.s32 %s15, %s16
        %s150 = smul.u32 2, %s149
      $region24: #{bridge_prob_loss.1} parent=15 // pred_fallthru
        _
    $region16: #{bridge_prob_loss.1} parent=5 // pred_fallthru
      _
    %p151 = scmp.le.s32.totalorder 1, %s8
    %p152 = scmp.lt.s32.totalorder %s8, 3
    %p153 = pnand %p151, %p152
    %p154 = pneg %p153
    // Predicated region
    $region25: #{bridge_prob_loss.1} parent=5 // pred_check
      _
    $region26: #{bridge_prob_loss.1} parent=5 // pred_check_branch
      %156 = sbr.rel (%p153) target = $region28
    $region27: #{bridge_prob_loss.1} parent=5 // pred_region
      %s157 = ssub.s32 %s8, 1
      %s158 = sadd.s32 %s17, %s18
      %s159 = smul.u32 2, %s158
      %s160 = ssub.s32 3, %s159
      %p161 = scmp.lt.s32.totalorder %s160, 2
      %s162 = scalar_select %p161, %s160, 2
      %s163 = smul.u32 8, %s162
      %p164 = scmp.lt.s32.totalorder %s159, 2
      %s165 = scalar_select %p164, %s159, 2
      %s166 = smul.addr %s165, 8
      %s167 = scalar_lea.vmem %s0, %s166
      %p168 = pneg %p48
      %p169 = pneg %p45
      %s170 = sadd.s32 %s17, %s18
      %s171 = smul.u32 2, %s170
      %p172 = scmp.lt.s32.totalorder %s171, 3
      %s173 = scalar_select %p172, %s171, 3
      %s174 = smul.addr %s173, 8
      %s175 = scalar_lea.vmem %s1, %s174
      %p176 = pneg %p76
      %p177 = pneg %p73
      %p178 = pneg %p102
      %p179 = pneg %p99
      %p180 = scmp.lt.s32.totalorder %s17, 1
      %s181 = scalar_select %p180, %s17, 1
      %s182 = smul.addr %s181, 8
      %s183 = scalar_lea.vmem %s2, %s182
      %s184 = sadd.s32 %s17, %s18
      %s185 = smul.u32 2, %s184
      %s186 = ssub.s32 3, %s185
      %p187 = scmp.lt.s32.totalorder %s186, 2
      %s188 = scalar_select %p187, %s186, 2
      %s189 = smul.u32 8, %s188
      %p190 = scmp.lt.s32.totalorder %s185, 2
      %s191 = scalar_select %p190, %s185, 2
      %s192 = smul.addr %s191, 8
      %s193 = scalar_lea.vmem %s0, %s192
      %s194 = sadd.s32 %s17, %s18
      %s195 = smul.u32 2, %s194
      %s196 = ssub.s32 3, %s195
      %p197 = scmp.lt.s32.totalorder %s196, 2
      %s198 = scalar_select %p197, %s196, 2
      %s199 = smul.u32 8, %s198
      %s200 = sadd.s32 %s17, %s18
      %s201 = smul.u32 2, %s200
      %p202 = scmp.lt.s32.totalorder %s201, 3
      %s203 = scalar_select %p202, %s201, 3
      %s204 = smul.addr %s203, 8
      %s205 = scalar_lea.vmem %s1, %s204
      %s206 = sadd.s32 %s17, %s18
      %s207 = smul.u32 2, %s206
      %p208 = scmp.lt.s32.totalorder %s17, 1
      %s209 = scalar_select %p208, %s17, 1
      %s210 = smul.addr %s209, 8
      %s211 = scalar_lea.vmem %s2, %s210
      %p212 = scmp.eq.s32.totalorder %s18, 0
      // Predicated region
      $region29: #{bridge_prob_loss.1} parent=27 // pred_check
        %p213 = pneg %p212
      $region30: #{bridge_prob_loss.1} parent=27 // pred_check_branch
        %215 = sbr.rel (%p213) target = $region32
      $region31: #{bridge_prob_loss.1} parent=27 // pred_region
        %s216 = scalar_lea.smem [#allocation2], 0
        %217 = sst [smem:[%s216]] 0.0
        %s218 = scalar_lea.smem [#allocation2], 1
        %219 = sst [smem:[%s218]] 0.0
      $region32: #{bridge_prob_loss.1} parent=27 // pred_fallthru
        _
      %v220 = vld [vmem:[%s193] sm:$0xff]
      %v221 = vld [vmem:[%s193 + $0x8] sm:$0xff]
      %222 = vmax.xlane.f32.xlu0 %v220
      %v223 = vpop.xlane.xlu0 %222
      %224 = vmax.xlane.f32.xlu0 %v221
      %v225 = vpop.xlane.xlu0 %224
      %v226 = vsub.f32 %v220, %v223
      %v227 = vsub.f32 %v221, %v225
      %v228 = vmul.f32 %v226, 1.442695
      %v229 = vpow.pop %v228
      %v230 = vmul.f32 %v227, 1.442695
      %v231 = vpow.pop %v230
      %232 = vadd.xlane.f32.xlu0 %v229
      %v233 = vpop.xlane.xlu0 %232
      %234 = vadd.xlane.f32.xlu0 %v231
      %v235 = vpop.xlane.xlu0 %234
      %v236 = vlog2.pop %v233
      %v237 = vmul.f32 %v236, 0.6931472
      %v238 = vlog2.pop %v235
      %v239 = vmul.f32 %v238, 0.6931472
      %v240 = vld [vmem:[%s205] sm:$0xff]
      %v241 = vld [vmem:[%s205 + $0x8] sm:$0xff]
      %v242 = vcvt.f32.s32.to.zero.pseudo %v240
      %v243 = vcvt.f32.s32.to.zero.pseudo %v241
      %v244 = vmul.f32 %v240, 0.9
      %v245 = vmul.f32 %v241, 0.9
      %v246 = vlaneseq
      %v247 = vand.u32 %v246, 127
      %248 = vset.pattern.permute.xlu0 0
      %249 = vperm.xlu0 %248, %v242
      %v250 = vpop.permute.xlu0 %249
      %251 = vset.pattern.permute.xlu0 0
      %252 = vperm.xlu0 %251, %v243
      %v253 = vpop.permute.xlu0 %252
      %vm254 = vcmp.eq.s32.totalorder %v247, %v250
      %vm255 = vcmp.eq.s32.totalorder %v247, %v253
      %257 = vset.pattern.permute.xlu0 2
      %258 = vperm.xlu0 %257, %v244
      %v259 = vpop.permute.xlu0 %258
      %262 = vset.pattern.permute.xlu0 2
      %263 = vperm.xlu0 %262, %v245
      %v264 = vpop.permute.xlu0 %263
      %v266 = vsel %vm254, %v259, 0.0
      %v267 = vsel %vm255, %v264, 0.0
      %268 = vset.pattern.permute.xlu0 1
      %269 = vperm.xlu0 %268, %v242
      %v270 = vpop.permute.xlu0 %269
      %271 = vset.pattern.permute.xlu0 1
      %272 = vperm.xlu0 %271, %v243
      %v273 = vpop.permute.xlu0 %272
      %vm274 = vcmp.eq.s32.totalorder %v247, %v270
      %vm275 = vcmp.eq.s32.totalorder %v247, %v273
      %276 = vset.pattern.permute.xlu0 3
      %277 = vperm.xlu0 %276, %v244
      %v278 = vpop.permute.xlu0 %277
      %280 = vset.pattern.permute.xlu0 3
      %281 = vperm.xlu0 %280, %v245
      %v282 = vpop.permute.xlu0 %281
      %v284 = vsel %vm274, %v278, 0.0
      %v285 = vsel %vm275, %v282, 0.0
      %v286 = vadd.f32 %v266, %v284
      %v287 = vadd.f32 %v267, %v285
      %v288 = vadd.f32 %v286, 0.00078125
      %v289 = vadd.f32 %v287, 0.00078125
      %v290 = vmul.f32 %v288, %v226
      %v291 = vmul.f32 %v289, %v227
      %292 = vadd.xlane.f32.xlu0 %v290
      %v293 = vpop.xlane.xlu0 %292
      %294 = vadd.xlane.f32.xlu0 %v291
      %v295 = vpop.xlane.xlu0 %294
      %296 = vrot.lane.b32.xlu0 %v244, 127
      %v297 = vpop.permute.xlu0 %296
      %298 = vrot.lane.b32.xlu0 %v245, 127
      %v299 = vpop.permute.xlu0 %298
      %v302 = vadd.f32 %v244, %v297
      %v303 = vadd.f32 %v245, %v299
      %v304 = vadd.f32 %v302, 0.1
      %v305 = vadd.f32 %v303, 0.1
      %v306 = vmul.f32 %v304, %v237
      %v307 = vmul.f32 %v305, %v239
      %v308 = vsub.f32 %v306, %v293
      %v309 = vsub.f32 %v307, %v295
      %s310 = sld [smem:[#allocation2]]
      %vm311 = vcmp.gt.f32.partialorder %v240, 0.0
      %vm312 = vcmp.gt.f32.partialorder %v241, 0.0
      %315 = vrot.lane.b32.xlu0 %v308, 2
      %v316 = vpop.permute.xlu0 %315
      %317 = vrot.lane.b32.xlu0 %v309, 2
      %v318 = vpop.permute.xlu0 %317
      %v321 = vsel %vm311, %v316, 0.0
      %v322 = vsel %vm312, %v318, 0.0
      %325 = vrot.lane.b32.xlu0 %v321, 124
      %v326 = vpop.permute.xlu0 %325
      %327 = vrot.lane.b32.xlu0 %v322, 124
      %v328 = vpop.permute.xlu0 %327
      %vm331 = vcmask 7168
      %v332 = vsel %vm331, %v326, 0.0
      %v333 = vsel %vm331, %v328, 0.0
      %v334 = vadd.f32 %v332, %v333
      %335 = vadd.xlane.f32.xlu0 %v334
      %v336 = vpop.xlane.xlu0 %335
      %v337 = vrot.slane %v336, 4
      %v338 = vadd.f32 %v336, %v337
      %v339 = vrot.slane %v338, 2
      %v340 = vadd.f32 %v338, %v339
      %v341 = vrot.slane %v340, 1
      %v342 = vadd.f32 %v340, %v341
      %s343 = vtos %v342
      %s344 = sadd.f32 %s310, %s343
      %s345 = scalar_lea.smem [#allocation2], 0
      %346 = sst [smem:[%s345]] %s344
      %s347 = sld [smem:[#allocation2 + $0x1]]
      %348 = vrot.lane.b32.xlu0 %v308, 3
      %v349 = vpop.permute.xlu0 %348
      %350 = vrot.lane.b32.xlu0 %v309, 3
      %v351 = vpop.permute.xlu0 %350
      %v354 = vsel %vm311, %v349, 0.0
      %v355 = vsel %vm312, %v351, 0.0
      %358 = vrot.lane.b32.xlu0 %v354, 123
      %v359 = vpop.permute.xlu0 %358
      %360 = vrot.lane.b32.xlu0 %v355, 123
      %v361 = vpop.permute.xlu0 %360
      %v364 = vsel %vm331, %v359, 0.0
      %v365 = vsel %vm331, %v361, 0.0
      %v366 = vadd.f32 %v364, %v365
      %367 = vadd.xlane.f32.xlu0 %v366
      %v368 = vpop.xlane.xlu0 %367
      %v369 = vrot.slane %v368, 4
      %v370 = vadd.f32 %v368, %v369
      %v371 = vrot.slane %v370, 2
      %v372 = vadd.f32 %v370, %v371
      %v373 = vrot.slane %v372, 1
      %v374 = vadd.f32 %v372, %v373
      %s375 = vtos %v374
      %s376 = sadd.f32 %s347, %s375
      %s377 = scalar_lea.smem [#allocation2], 1
      %378 = sst [smem:[%s377]] %s376
      // Predicated region
      $region33: #{bridge_prob_loss.1} parent=27 // pred_check
        %p379 = pneg %p212
      $region34: #{bridge_prob_loss.1} parent=27 // pred_check_branch
        %381 = sbr.rel (%p379) target = $region36
      $region35: #{bridge_prob_loss.1} parent=27 // pred_region
        %vm382 = vcmp.eq.s32.totalorder %v247, 0
        %s383 = sld [smem:[#allocation2]]
        %vm384 = vcmp.eq.s32.totalorder %v247, 1
        %s385 = sld [smem:[#allocation2 + $0x1]]
        %v386 = vstv %s385
        %v387 = vsel %vm384, %v386, 0.0
        %v388 = vstv %s383
        %v389 = vsel %vm382, %v388, %v387
        %390 = vst [vmem:[%s211] sm:$0xff] %v389
      $region36: #{bridge_prob_loss.1} parent=27 // pred_fallthru
        _
      %p391 = scmp.lt.s32.totalorder %s17, 1
      %s392 = scalar_select %p391, %s17, 1
      %s393 = smul.addr %s392, 8
      %s394 = scalar_lea.vmem %s2, %s393
      // Predicated region
      $region37: #{bridge_prob_loss.1} parent=27 // pred_check
        %p395 = pneg %p99
      $region38: #{bridge_prob_loss.1} parent=27 // pred_check_branch
        %397 = sbr.rel (%p395) target = $region40
      $region39: #{bridge_prob_loss.1} parent=27 // pred_region
        _
      $region40: #{bridge_prob_loss.1} parent=27 // pred_fallthru
        _
    $region28: #{bridge_prob_loss.1} parent=5 // pred_fallthru
      _
    %p398 = scmp.le.s32.totalorder 2, %s8
    // Predicated region
    $region41: #{bridge_prob_loss.1} parent=5 // pred_check
      %p399 = pneg %p398
    $region42: #{bridge_prob_loss.1} parent=5 // pred_check_branch
      %401 = sbr.rel (%p399) target = $region44
    $region43: #{bridge_prob_loss.1} parent=5 // pred_region
      %s402 = ssub.s32 %s8, 2
      // Predicated region
      $region45: #{bridge_prob_loss.1} parent=43 // pred_check
        %p403 = pneg %p105
      $region46: #{bridge_prob_loss.1} parent=43 // pred_check_branch
        %405 = sbr.rel (%p403) target = $region48
      $region47: #{bridge_prob_loss.1} parent=43 // pred_region
        %p406 = scmp.lt.s32.totalorder %s19, 1
        %s407 = scalar_select %p406, %s19, 1
        %s408 = smul.addr %s407, 8
        %s409 = scalar_lea.vmem %s2, %s408
      $region48: #{bridge_prob_loss.1} parent=43 // pred_fallthru
        _
    $region44: #{bridge_prob_loss.1} parent=5 // pred_fallthru
      _
  $region6: #{bridge_prob_loss.1} parent=0 // loop_footer
    %s12 = sadd.s32 1, %s8
  $region7: #{bridge_prob_loss.1} parent=0 // loop_footer_branch
    %7 = sbr.rel target = $region3
  $region8: #{bridge_prob_loss.1} parent=0 // loop_exit
    _

</llo_original>
